<compile_context>
chip_gen: v7x
topology: tpu7x:2x2x1
jax: 0.10.0
libtpu: 0.0.40
codegen_flags: <defaults>
</compile_context>

<pallas_src>
import functools
import math

import jax
import jax.numpy as jnp
from jax import lax
from jax.experimental import pallas as pl
from jax.experimental.pallas import tpu as pltpu

_VMEM_LIMIT = 32 * 1024 * 1024  # safe scoped-VMEM cap on v5e/v6e/v7x


def _mosaic(*dims):
    return pltpu.CompilerParams(dimension_semantics=dims,
                                vmem_limit_bytes=_VMEM_LIMIT)


def _bf16(x):
    return x.astype(jnp.bfloat16)


def _round_up(x, m):
    return -(-x // m) * m


def _row_tile(rows, tile):
    """Pick a row tile: as big as possible, multiple of 8, but >=2 grid steps
    when rows allow it (v7x megacore shards the parallel grid axis)."""
    t = min(tile, rows)
    if rows > 8 and rows // max(t, 1) < 2:
        t = max(8, rows // 2)
    if t % 8:
        t = max(8, (t // 8) * 8) if rows >= 8 else rows
    return min(t, rows)


# ----------------------------- Pallas kernels -------------------------------

def _fc1_chain_kernel(x_ref, w1_ref, b1_ref, wp_ref, bp_ref, o_ref, *, d_in):
    """Encoder fc1 first Linear + ReLU, then one packed matmul producing
    [pre | q | k | v] (encoder fc1 second Linear, attention fc1 and QKV are all
    affine, composed host-side)."""
    x = x_ref[...]
    if d_in <= 8:
        # tiny contraction: VPU broadcast-FMAs instead of a mostly-idle MXU pass
        h = x[:, 0:1] * w1_ref[0:1, :]
        for i in range(1, d_in):
            h = h + x[:, i:i + 1] * w1_ref[i:i + 1, :]
        h = h + b1_ref[...]
    else:
        h = jnp.dot(_bf16(x), _bf16(w1_ref[...]),
                    preferred_element_type=jnp.float32) + b1_ref[...]
    h = jnp.maximum(h, 0.0)
    out = jnp.dot(_bf16(h), wp_ref[...],
                  preferred_element_type=jnp.float32) + bp_ref[...]
    o_ref[...] = out.astype(o_ref.dtype)


def fc1_chain(x, w1, b1, wp, bp, *, tile_m=512):
    M, d_in = x.shape
    H = w1.shape[1]
    P = wp.shape[1]
    TM = _row_tile(M, tile_m)
    return pl.pallas_call(
        functools.partial(_fc1_chain_kernel, d_in=d_in),
        out_shape=jax.ShapeDtypeStruct((M, P), jnp.float32),
        grid=(pl.cdiv(M, TM),),
        in_specs=[pl.BlockSpec((TM, d_in), lambda i: (i, 0)),
                  pl.BlockSpec((d_in, H), lambda i: (0, 0)),
                  pl.BlockSpec((1, H), lambda i: (0, 0)),
                  pl.BlockSpec((H, P), lambda i: (0, 0)),
                  pl.BlockSpec((1, P), lambda i: (0, 0))],
        out_specs=pl.BlockSpec((TM, P), lambda i: (i, 0)),
        compiler_params=_mosaic("parallel"),
    )(x, w1, b1, wp, bp)


def _linear_kernel(x_ref, w_ref, b_ref, o_ref):
    y = jnp.dot(_bf16(x_ref[...]), w_ref[...],
                preferred_element_type=jnp.float32) + b_ref[...]
    o_ref[...] = y.astype(o_ref.dtype)


def qkv_project(x, w, b, *, tile_m=512):
    """Per-block fc1 + packed QKV composed into one affine map (lane-padded to 128)."""
    M, d_in = x.shape
    P = w.shape[1]
    TM = _row_tile(M, tile_m)
    return pl.pallas_call(
        _linear_kernel,
        out_shape=jax.ShapeDtypeStruct((M, P), jnp.float32),
        grid=(pl.cdiv(M, TM),),
        in_specs=[pl.BlockSpec((TM, d_in), lambda i: (i, 0)),
                  pl.BlockSpec((d_in, P), lambda i: (0, 0)),
                  pl.BlockSpec((1, P), lambda i: (0, 0))],
        out_specs=pl.BlockSpec((TM, P), lambda i: (i, 0)),
        compiler_params=_mosaic("parallel"),
    )(x, w, b)


def _pt_attn_kernel(q_ref, kg_ref, vg_ref, ph_ref, pre_ref,
                    gw1_ref, wpg_ref, gb1_ref, gw2_ref, gb2_ref,
                    dw2_ref, db2_ref, fc2w_ref, fc2b_ref,
                    o_ref, *, TQ, K, D):
    """Point-transformer attention core with the delta second layer folded into
    gamma layer-1 (W_pg = dw2 @ gw1) and fc2 + residual fused as the epilogue."""
    q = q_ref[...]                                         # (TQ, D)      f32
    kg = kg_ref[...].astype(jnp.float32).reshape(TQ, K, D)  # neighbors
    ph = ph_ref[...]                                       # (TQ*K, D)    bf16

    # gamma layer-1:  (q - k) @ gw1  +  ph @ (dw2 @ gw1)  +  (gb1 + db2 @ gw1)
    t = (q[:, None, :] - kg).reshape(TQ * K, D).astype(jnp.bfloat16)
    g = (jnp.dot(t, gw1_ref[...], preferred_element_type=jnp.float32)
         + jnp.dot(ph, wpg_ref[...], preferred_element_type=jnp.float32)
         + gb1_ref[...])
    g = jnp.maximum(g, 0.0)
    logits = jnp.dot(_bf16(g), gw2_ref[...],
                     preferred_element_type=jnp.float32) + gb2_ref[...]
    # TODO(synk): 1/sqrt(D) pre-softmax scale kept from the previous implementation;
    # canonical Point-Transformer vector attention omits it.
    logits = logits.reshape(TQ, K, D) * (1.0 / math.sqrt(D))

    # softmax over the neighbor axis (PyTorch dim=-2); exact normalization
    m = jnp.max(logits, axis=1, keepdims=True)
    e = jnp.exp(logits - m)
    attn = e / jnp.sum(e, axis=1, keepdims=True)

    # value path needs the full position encoding pos = ph @ dw2 + db2
    pos = jnp.dot(ph, dw2_ref[...], preferred_element_type=jnp.float32) + db2_ref[...]
    val = (vg_ref[...].astype(jnp.float32) + pos).reshape(TQ, K, D)
    res = jnp.sum(attn * val, axis=1)                      # (TQ, D)

    # fused fc2 + residual epilogue (d_points-wide, lane-dense at later blocks)
    out = (jnp.dot(_bf16(res), fc2w_ref[...], preferred_element_type=jnp.float32)
           + fc2b_ref[...] + pre_ref[...])
    o_ref[...] = out.astype(o_ref.dtype)


def pt_attention(q, k_g, v_g, ph, pre,
                 gw1, w_pg, gb1_eff, gw2, gb2, dw2, db2, fc2w, fc2b,
                 *, tile_q=128):
    M, D = q.shape
    dp = pre.shape[1]
    K = k_g.shape[0] // M
    TQ = _row_tile(M, tile_q)
    kern = functools.partial(_pt_attn_kernel, TQ=TQ, K=K, D=D)
    row = lambda shp: pl.BlockSpec(shp, lambda i: (i, 0))
    rep = lambda shp: pl.BlockSpec(shp, lambda i: (0, 0))
    return pl.pallas_call(
        kern,
        out_shape=jax.ShapeDtypeStruct((M, dp), jnp.float32),
        grid=(pl.cdiv(M, TQ),),
        in_specs=[row((TQ, D)), row((TQ * K, D)), row((TQ * K, D)),
                  row((TQ * K, D)), row((TQ, dp)),
                  rep((D, D)), rep((D, D)), rep((1, D)),
                  rep((D, D)), rep((1, D)),
                  rep((D, D)), rep((1, D)),
                  rep((D, dp)), rep((1, dp))],
        out_specs=row((TQ, dp)),
        compiler_params=_mosaic("parallel"),
    )(q, k_g, v_g, ph, pre, gw1, w_pg, gb1_eff, gw2, gb2, dw2, db2, fc2w, fc2b)


def _sa_kernel(pts_ref, xc_ref, w1p_ref, b1_ref, w2_ref, b2_ref, o_ref,
               *, TS, K, C2):
    """Shared MLP (1x1 conv + folded BN + ReLU) x2, then max-pool over neighbors.
    The 3-wide xyz contribution arrives precomputed (xc); points part on the MXU."""
    h = jnp.dot(pts_ref[...], w1p_ref[...], preferred_element_type=jnp.float32)
    h = jnp.maximum(h + xc_ref[...].astype(jnp.float32) + b1_ref[...], 0.0)
    h2 = jnp.dot(_bf16(h), w2_ref[...],
                 preferred_element_type=jnp.float32) + b2_ref[...]
    h2 = jnp.maximum(h2, 0.0)
    o_ref[...] = jnp.max(h2.reshape(TS, K, C2), axis=1).astype(o_ref.dtype)


def sa_mlp_maxpool(pts_flat, xc_flat, w1p, b1, w2, b2, *, rows, K, tile_s=128):
    C = pts_flat.shape[1]
    C1, C2 = w2.shape
    TS = _row_tile(rows, tile_s)
    kern = functools.partial(_sa_kernel, TS=TS, K=K, C2=C2)
    rep = lambda shp: pl.BlockSpec(shp, lambda i: (0, 0))
    return pl.pallas_call(
        kern,
        out_shape=jax.ShapeDtypeStruct((rows, C2), jnp.float32),
        grid=(pl.cdiv(rows, TS),),
        in_specs=[pl.BlockSpec((TS * K, C), lambda i: (i, 0)),
                  pl.BlockSpec((TS * K, C1), lambda i: (i, 0)),
                  rep((C, C1)), rep((1, C1)),
                  rep((C1, C2)), rep((1, C2))],
        out_specs=pl.BlockSpec((TS, C2), lambda i: (i, 0)),
        compiler_params=_mosaic("parallel"),
    )(pts_flat, xc_flat, w1p, b1, w2, b2)


# ------------------------------- JAX glue -----------------------------------

def square_distance(a, b):
    # a:(B,N,3), b:(B,M,3) -> (B,N,M) squared distances
    return (jnp.sum(a * a, -1)[:, :, None] + jnp.sum(b * b, -1)[:, None, :]
            - 2.0 * jnp.einsum('bnd,bmd->bnm', a, b))


def knn_indices(query_xyz, ref_xyz, k):
    d = square_distance(query_xyz, ref_xyz)
    _, idx = lax.top_k(-d, k)
    return idx


def index_points(points, idx):
    # points:(B,N,C), idx:(B,...) int -> (B,...,C)
    return jax.vmap(lambda p, i: p[i])(points, idx)


def farthest_point_sample(xyz, npoint):
    # TODO(synk): PyTorch FPS starts from a random index; we start from 0 for determinism.
    def single(pc):
        n = pc.shape[0]

        def body(i, state):
            cent, dist, far = state
            cent = cent.at[i].set(far)
            d = jnp.sum((pc - pc[far]) ** 2, axis=-1)
            dist = jnp.minimum(dist, d)
            return cent, dist, jnp.argmax(dist).astype(jnp.int32)

        cent0 = jnp.zeros((npoint,), jnp.int32)
        dist0 = jnp.full((n,), 1e10, jnp.float32)
        cent, _, _ = lax.fori_loop(0, npoint, body, (cent0, dist0, jnp.int32(0)))
        return cent

    return jax.vmap(single)(xyz)


# ----------------------------- module applies --------------------------------

def _attention_core(p, xyz_q, pre, q, kk, vv, xyz_kv, nneighbor):
    """Shared attention body.  pre/q: (B*Nq, .), kk/vv: (B*Nkv, D)."""
    # TODO(synk): Self_attention_block's knn=False branch (ball query) source is not
    # provided; knn neighbor selection is used for all blocks.
    B, Nq, _ = xyz_q.shape
    Nkv = xyz_kv.shape[1]
    D = q.shape[1]
    dp = pre.shape[1]
    k = min(nneighbor, Nkv)

    knn_idx = knn_indices(xyz_q, xyz_kv, k)                  # (B,Nq,k)
    knn_xyz = index_points(xyz_kv, knn_idx)                  # (B,Nq,k,3)
    rel = xyz_q[:, :, None, :] - knn_xyz                     # (B,Nq,k,3)
    # 3-wide delta layer-1 precomputed here (avoids lane-padded (...,3) kernel tiles)
    ph = jnp.maximum(jnp.einsum('bnkc,cd->bnkd', rel, p['delta_w1'])
                     + p['delta_b1'][0], 0.0)
    ph = _bf16(ph).reshape(B * Nq * k, D)

    kk3 = _bf16(kk).reshape(B, Nkv, D)
    vv3 = _bf16(vv).reshape(B, Nkv, D)
    k_g = index_points(kk3, knn_idx).reshape(B * Nq * k, D)
    v_g = index_points(vv3, knn_idx).reshape(B * Nq * k, D)

    out = pt_attention(q, k_g, v_g, ph, pre,
                       p['gamma_w1'], p['w_pg'], p['gb1_eff'],
                       p['gamma_w2'], p['gamma_b2'],
                       p['delta_w2'], p['delta_b2'],
                       p['fc2_w'], p['fc2_b'])
    return out.reshape(B, Nq, dp)


def apply_transformer1(p_chain, p_attn, xyz, x, nneighbor):
    """encoder fc1 + transformer1 fc1 + QKV chained in one kernel, then attention."""
    B, N, d_in = x.shape
    D = p_attn['gamma_w2'].shape[0]
    F = p_attn['fc2_w'].shape[1]                 # pre width == d_points of the block
    out = fc1_chain(x.reshape(B * N, d_in),
                    p_chain['w1'], p_chain['b1'], p_chain['wp'], p_chain['bp'])
    pre = out[:, :F]
    q = out[:, F:F + D]
    kk = out[:, F + D:F + 2 * D]
    vv = out[:, F + 2 * D:F + 3 * D]
    return _attention_core(p_attn, xyz, pre, q, kk, vv, xyz, nneighbor)


def apply_self_attention(p, xyz, feats, nneighbor):
    B, N, dp = feats.shape
    D = p['gamma_w2'].shape[0]
    qkv = qkv_project(feats.reshape(B * N, dp), p['qkv_w'], p['qkv_b'])
    q, kk, vv = qkv[:, :D], qkv[:, D:2 * D], qkv[:, 2 * D:3 * D]
    return _attention_core(p, xyz, feats.reshape(B * N, dp), q, kk, vv, xyz, nneighbor)


def apply_cross_attention(p, xyz_q, feats_q, xyz_kv, feats_kv, nneighbor):
    B, Nq, dp = feats_q.shape
    Nkv = feats_kv.shape[1]
    D = p['gamma_w2'].shape[0]
    qkv_q = qkv_project(feats_q.reshape(B * Nq, dp), p['qkv_w'], p['qkv_b'])
    qkv_kv = qkv_project(feats_kv.reshape(B * Nkv, feats_kv.shape[-1]),
                         p['qkv_w'], p['qkv_b'])
    q = qkv_q[:, :D]
    kk = qkv_kv[:, D:2 * D]
    vv = qkv_kv[:, 2 * D:3 * D]
    return _attention_core(p, xyz_q, feats_q.reshape(B * Nq, dp), q, kk, vv,
                           xyz_kv, nneighbor)


def apply_transition_down(p, xyz, points, npoint, nsample):
    B, N, _ = xyz.shape
    C = points.shape[-1]
    C1 = p['w1p'].shape[1]
    K = min(nsample, N)
    fps_idx = farthest_point_sample(xyz, npoint)             # (B,S)
    new_xyz = index_points(xyz, fps_idx)                     # (B,S,3)
    idx = knn_indices(new_xyz, xyz, K)                       # (B,S,K)
    grouped_xyz = index_points(xyz, idx)
    grouped_xyz_norm = grouped_xyz - new_xyz[:, :, None, :]
    # 3-wide xyz contribution of conv layer-1 precomputed here
    xc = jnp.einsum('bskc,cd->bskd', grouped_xyz_norm, p['w1x'])
    xc = _bf16(xc).reshape(B * npoint * K, C1)
    grouped_points = index_points(_bf16(points), idx).reshape(B * npoint * K, C)
    new_points = sa_mlp_maxpool(grouped_points, xc, p['w1p'], p['b1'],
                                p['w2'], p['b2'], rows=B * npoint, K=K)
    return new_xyz, new_points.reshape(B, npoint, -1)


# ----------------------------- parameter init --------------------------------

def init_linear(key, fan_in, fan_out, bias=True):
    kw, kb = jax.random.split(key)
    s = 1.0 / (fan_in ** 0.5)
    w = jax.random.uniform(kw, (fan_in, fan_out), jnp.float32, -s, s)
    if bias:
        b = jax.random.uniform(kb, (1, fan_out), jnp.float32, -s, s)
    else:
        b = jnp.zeros((1, fan_out), jnp.float32)
    return w, b


def init_attention_block(key, d_points, d_model):
    ks = jax.random.split(key, 9)
    fc1_w, fc1_b = init_linear(ks[0], d_points, d_model)
    fc2_w, fc2_b = init_linear(ks[1], d_model, d_points)
    dw1, db1 = init_linear(ks[2], 3, d_model)
    dw2, db2 = init_linear(ks[3], d_model, d_model)
    gw1, gb1 = init_linear(ks[4], d_model, d_model)
    gw2, gb2 = init_linear(ks[5], d_model, d_model)
    wq, _ = init_linear(ks[6], d_model, d_model, bias=False)
    wk, _ = init_linear(ks[7], d_model, d_model, bias=False)
    wv, _ = init_linear(ks[8], d_model, d_model, bias=False)
    wqkv = jnp.concatenate([wq, wk, wv], axis=1)             # (D, 3D)

    p = {}
    # fc1 -> packed QKV composed into a single affine map, padded to 128 lanes
    qkv_w = fc1_w @ wqkv
    qkv_b = fc1_b @ wqkv
    P = _round_up(3 * d_model, 128)
    p['qkv_w'] = _bf16(jnp.pad(qkv_w, ((0, 0), (0, P - 3 * d_model))))
    p['qkv_b'] = jnp.pad(qkv_b, ((0, 0), (0, P - 3 * d_model)))
    # raw pieces kept in f32 so the encoder-level fc1 chain can also be composed
    p['fc1_w'] = fc1_w
    p['fc1_b'] = fc1_b
    p['wqkv_raw'] = wqkv
    # delta (position-encoding) MLP; layer-1 applied in the JAX gather epilogue
    p['delta_w1'] = dw1
    p['delta_b1'] = db1
    p['delta_w2'] = _bf16(dw2)
    p['delta_b2'] = db2
    # gamma MLP; delta layer-2 folded into gamma layer-1
    p['gamma_w1'] = _bf16(gw1)
    p['w_pg'] = _bf16(dw2 @ gw1)
    p['gb1_eff'] = gb1 + db2 @ gw1
    p['gamma_w2'] = _bf16(gw2)
    p['gamma_b2'] = gb2
    p['fc2_w'] = _bf16(fc2_w)
    p['fc2_b'] = fc2_b
    return p


def init_transition_down(key, in_pts_ch, mlp):
    # BatchNorm2d at default init (gamma=1, beta=0, running stats 0/1, eps=1e-5)
    # folded into the 1x1 conv weights/biases.
    # TODO(synk): real checkpoints need their actual running stats folded in.
    k1, k2 = jax.random.split(key)
    in_ch = in_pts_ch + 3
    w1, b1 = init_linear(k1, in_ch, mlp[0])
    w2, b2 = init_linear(k2, mlp[0], mlp[1])
    bn = 1.0 / jnp.sqrt(1.0 + 1e-5)
    return {'w1x': w1[:3] * bn,                 # f32, used in the JAX xyz precompute
            'w1p': _bf16(w1[3:] * bn), 'b1': b1 * bn,
            'w2': _bf16(w2 * bn), 'b2': b2 * bn}


def init_encoder(key, cfg):
    nblocks = cfg['nblocks']
    ks = jax.random.split(key, 4 + 2 * nblocks)
    params = {}
    w1, b1 = init_linear(ks[0], cfg['input_dim'], 32)
    w2, b2 = init_linear(ks[1], 32, 32)
    t1 = init_attention_block(ks[2], 32, cfg['transformer_dim'])
    # Compose encoder fc1 second Linear + transformer1 fc1 + QKV (all affine) into
    # one matmul with output layout [ pre(32) | q | k | v ]  (lane-dense).
    chain_w = jnp.concatenate([w2, w2 @ t1['fc1_w'] @ t1['wqkv_raw']], axis=1)
    chain_b = jnp.concatenate([b2, (b2 @ t1['fc1_w'] + t1['fc1_b']) @ t1['wqkv_raw']],
                              axis=1)
    P = _round_up(chain_w.shape[1], 128)
    params['fc1_t1'] = {
        'w1': w1, 'b1': b1,
        'wp': _bf16(jnp.pad(chain_w, ((0, 0), (0, P - chain_w.shape[1])))),
        'bp': jnp.pad(chain_b, ((0, 0), (0, P - chain_b.shape[1])))}
    params['transformer1'] = t1
    params['td'], params['tf'] = [], []
    channel = 32
    for i in range(nblocks):
        channel = 32 * 2 ** (i + 1)
        params['td'].append(init_transition_down(ks[3 + 2 * i], channel // 2,
                                                 [channel, channel]))
        params['tf'].append(init_attention_block(ks[4 + 2 * i], channel,
                                                 cfg['transformer_dim']))
    params['cross'] = init_attention_block(ks[3 + 2 * nblocks], channel,
                                           cfg['transformer_dim'])
    return params


# ------------------------------ Encoder fwd ----------------------------------

def encoder_forward(params, cfg, x1, x2):
    nblocks, nneighbor, npoints = cfg['nblocks'], cfg['nneighbor'], cfg['num_point']
    xyz1, xyz2 = x1[..., :3], x2[..., :3]
    points1 = apply_transformer1(params['fc1_t1'], params['transformer1'],
                                 xyz1, x1, nneighbor)
    points2 = apply_transformer1(params['fc1_t1'], params['transformer1'],
                                 xyz2, x2, nneighbor)
    xyz_and_feats1 = [(xyz1, points1)]
    xyz_and_feats2 = [(xyz2, points2)]
    for i in range(nblocks):
        npoint = npoints // (4 ** (i + 1))
        xyz1, points1 = apply_transition_down(params['td'][i], xyz1, points1,
                                              npoint, nneighbor)
        xyz2, points2 = apply_transition_down(params['td'][i], xyz2, points2,
                                              npoint, nneighbor)
        points1 = apply_self_attention(params['tf'][i], xyz1, points1, nneighbor)
        points2 = apply_self_attention(params['tf'][i], xyz2, points2, nneighbor)
        xyz_and_feats1.append((xyz1, points1))
        xyz_and_feats2.append((xyz2, points2))
    points1 = apply_cross_attention(params['cross'], xyz1, points1,
                                    xyz2, points2, nneighbor)
    return points1, xyz_and_feats1, xyz_and_feats2


# ---------------------------------- main --------------------------------------

if __name__ == "__main__":
    cfg = dict(num_point=128, nblocks=2, nneighbor=8, num_class=2,
               input_dim=4, transformer_dim=32)

    key = jax.random.PRNGKey(0)
    kp, kx1, kx2 = jax.random.split(key, 3)
    params = init_encoder(kp, cfg)

    B, N, d = 2, cfg['num_point'], cfg['input_dim']
    x1 = jax.random.normal(kx1, (B, N, d), jnp.float32)
    x2 = jax.random.normal(kx2, (B, N, d), jnp.float32)

    points1, feats1, feats2 = encoder_forward(params, cfg, x1, x2)
    jax.block_until_ready(points1)
    for xyz, f in feats1 + feats2:
        jax.block_until_ready(f)

    final_c = 32 * 2 ** cfg['nblocks']
    assert points1.shape == (B, N // 4 ** cfg['nblocks'], final_c), points1.shape
    assert jnp.all(jnp.isfinite(points1))
    print("KERNEL_OK")
</pallas_src>

<mosaic_0001>
module attributes {stable_mosaic.version = 11 : i64} {
  func.func @_fc1_chain_kernel(%arg0: i32, %arg1: memref<128x4xf32, #tpu.memory_space<vmem>>, %arg2: memref<4x32xf32, #tpu.memory_space<vmem>>, %arg3: memref<1x32xf32, #tpu.memory_space<vmem>>, %arg4: memref<32x128xbf16, #tpu.memory_space<vmem>>, %arg5: memref<1x128xf32, #tpu.memory_space<vmem>>, %arg6: memref<128x128xf32, #tpu.memory_space<vmem>>) attributes {dimension_semantics = [#tpu.dimension_semantics<parallel>], iteration_bounds = array<i64: 2>, scalar_prefetch = 0 : i64, scratch_operands = 0 : i64, tpu.core_type = #tpu.core_type<tc>, window_params = [{transform_indices = @transform_0, window_bounds = array<i64: 128, 4>}, {pipeline_mode = #tpu.pipeline_mode<synchronous>, transform_indices = @transform_1, window_bounds = array<i64: 4, 32>}, {pipeline_mode = #tpu.pipeline_mode<synchronous>, transform_indices = @transform_2, window_bounds = array<i64: 1, 32>}, {pipeline_mode = #tpu.pipeline_mode<synchronous>, transform_indices = @transform_3, window_bounds = array<i64: 32, 128>}, {pipeline_mode = #tpu.pipeline_mode<synchronous>, transform_indices = @transform_4, window_bounds = array<i64: 1, 128>}, {transform_indices = @transform_5, window_bounds = array<i64: 128, 128>}]} {
    %c0 = arith.constant 0 : index
    %c0_0 = arith.constant 0 : index
    %0 = vector.load %arg1[%c0, %c0_0] : memref<128x4xf32, #tpu.memory_space<vmem>>, vector<128x4xf32>
    %1 = vector.extract_strided_slice %0 {offsets = [0, 0], sizes = [128, 1], strides = [1, 1]} : vector<128x4xf32> to vector<128x1xf32>
    %c0_1 = arith.constant 0 : index
    %c0_2 = arith.constant 0 : index
    %2 = vector.load %arg2[%c0_1, %c0_2] : memref<4x32xf32, #tpu.memory_space<vmem>>, vector<1x32xf32>
    %3 = vector.broadcast %1 : vector<128x1xf32> to vector<128x32xf32>
    %4 = vector.broadcast %2 : vector<1x32xf32> to vector<128x32xf32>
    %5 = arith.mulf %3, %4 : vector<128x32xf32>
    %6 = vector.extract_strided_slice %0 {offsets = [0, 1], sizes = [128, 1], strides = [1, 1]} : vector<128x4xf32> to vector<128x1xf32>
    %c1 = arith.constant 1 : index
    %c0_3 = arith.constant 0 : index
    %7 = vector.load %arg2[%c1, %c0_3] : memref<4x32xf32, #tpu.memory_space<vmem>>, vector<1x32xf32>
    %8 = vector.broadcast %6 : vector<128x1xf32> to vector<128x32xf32>
    %9 = vector.broadcast %7 : vector<1x32xf32> to vector<128x32xf32>
    %10 = arith.mulf %8, %9 : vector<128x32xf32>
    %11 = arith.addf %5, %10 : vector<128x32xf32>
    %12 = vector.extract_strided_slice %0 {offsets = [0, 2], sizes = [128, 1], strides = [1, 1]} : vector<128x4xf32> to vector<128x1xf32>
    %c2 = arith.constant 2 : index
    %c0_4 = arith.constant 0 : index
    %13 = vector.load %arg2[%c2, %c0_4] : memref<4x32xf32, #tpu.memory_space<vmem>>, vector<1x32xf32>
    %14 = vector.broadcast %12 : vector<128x1xf32> to vector<128x32xf32>
    %15 = vector.broadcast %13 : vector<1x32xf32> to vector<128x32xf32>
    %16 = arith.mulf %14, %15 : vector<128x32xf32>
    %17 = arith.addf %11, %16 : vector<128x32xf32>
    %18 = vector.extract_strided_slice %0 {offsets = [0, 3], sizes = [128, 1], strides = [1, 1]} : vector<128x4xf32> to vector<128x1xf32>
    %c3 = arith.constant 3 : index
    %c0_5 = arith.constant 0 : index
    %19 = vector.load %arg2[%c3, %c0_5] : memref<4x32xf32, #tpu.memory_space<vmem>>, vector<1x32xf32>
    %20 = vector.broadcast %18 : vector<128x1xf32> to vector<128x32xf32>
    %21 = vector.broadcast %19 : vector<1x32xf32> to vector<128x32xf32>
    %22 = arith.mulf %20, %21 : vector<128x32xf32>
    %23 = arith.addf %17, %22 : vector<128x32xf32>
    %c0_6 = arith.constant 0 : index
    %c0_7 = arith.constant 0 : index
    %24 = vector.load %arg3[%c0_6, %c0_7] : memref<1x32xf32, #tpu.memory_space<vmem>>, vector<1x32xf32>
    %25 = vector.broadcast %24 : vector<1x32xf32> to vector<128x32xf32>
    %26 = arith.addf %23, %25 : vector<128x32xf32>
    %cst = arith.constant 0.000000e+00 : f32
    %27 = vector.broadcast %cst : f32 to vector<128x32xf32>
    %28 = arith.maximumf %26, %27 : vector<128x32xf32>
    %29 = arith.truncf %28 : vector<128x32xf32> to vector<128x32xbf16>
    %c0_8 = arith.constant 0 : index
    %c0_9 = arith.constant 0 : index
    %30 = vector.load %arg4[%c0_8, %c0_9] : memref<32x128xbf16, #tpu.memory_space<vmem>>, vector<32x128xbf16>
    %cst_10 = arith.constant dense<0.000000e+00> : vector<128x128xf32>
    %31 = tpu.matmul %29, %30, %cst_10 {dimension_numbers = #tpu.dot_dimension_numbers<[1], [0], [0], [1], [0, 0, 1, 1], [], []>} : vector<128x32xbf16>, vector<32x128xbf16>, vector<128x128xf32> -> vector<128x128xf32>
    %c0_11 = arith.constant 0 : index
    %c0_12 = arith.constant 0 : index
    %32 = vector.load %arg5[%c0_11, %c0_12] : memref<1x128xf32, #tpu.memory_space<vmem>>, vector<1x128xf32>
    %33 = vector.broadcast %32 : vector<1x128xf32> to vector<128x128xf32>
    %34 = arith.addf %31, %33 : vector<128x128xf32>
    %c0_13 = arith.constant 0 : index
    %c0_14 = arith.constant 0 : index
    %35 = vector.load %arg6[%c0_13, %c0_14] : memref<128x128xf32, #tpu.memory_space<vmem>>, vector<128x128xf32>
    tpu.vector_store %arg6[%c0_13, %c0_14], %34 {strides = array<i32>} : memref<128x128xf32, #tpu.memory_space<vmem>>, vector<128x128xf32>,
    return
  }
  func.func @transform_0(%arg0: i32) -> (i32, i32) {
    %c0_i32 = arith.constant 0 : i32
    %c0_i32_0 = arith.constant 0 : i32
    return %arg0, %c0_i32 : i32, i32
  }
  func.func @transform_1(%arg0: i32) -> (i32, i32) {
    %c0_i32 = arith.constant 0 : i32
    %c0_i32_0 = arith.constant 0 : i32
    %c0_i32_1 = arith.constant 0 : i32
    return %c0_i32, %c0_i32_0 : i32, i32
  }
  func.func @transform_2(%arg0: i32) -> (i32, i32) {
    %c0_i32 = arith.constant 0 : i32
    %c0_i32_0 = arith.constant 0 : i32
    %c0_i32_1 = arith.constant 0 : i32
    return %c0_i32, %c0_i32_0 : i32, i32
  }
  func.func @transform_3(%arg0: i32) -> (i32, i32) {
    %c0_i32 = arith.constant 0 : i32
    %c0_i32_0 = arith.constant 0 : i32
    %c0_i32_1 = arith.constant 0 : i32
    return %c0_i32, %c0_i32_0 : i32, i32
  }
  func.func @transform_4(%arg0: i32) -> (i32, i32) {
    %c0_i32 = arith.constant 0 : i32
    %c0_i32_0 = arith.constant 0 : i32
    %c0_i32_1 = arith.constant 0 : i32
    return %c0_i32, %c0_i32_0 : i32, i32
  }
  func.func @transform_5(%arg0: i32) -> (i32, i32) {
    %c0_i32 = arith.constant 0 : i32
    %c0_i32_0 = arith.constant 0 : i32
    return %arg0, %c0_i32 : i32, i32
  }
}

</mosaic_0001>

<llo_original>
// kernel: tpu_custom_call.1
$region0: #{tpu_custom_call.1}
  #allocation0 [shape = 'u32[]', space=smem, size = 0x4, offset = 0x4, fixed_abs, tag = 'smem constant byte address 0x4 - core index']
  #allocation1 [shape = 'u32[144,128]{1,0:T(1,128)}', space=vmem, size = 0x12000, scoped, tag = 'internal scratch']
  %s0 = inlined_call_operand.vmem [shape: f32[256,4], index: 0, kind: input, shape index: {}]
  %s1 = inlined_call_operand.vmem [shape: f32[4,32], index: 1, kind: input, shape index: {}]
  %s2 = inlined_call_operand.vmem [shape: f32[1,32], index: 2, kind: input, shape index: {}]
  %s3 = inlined_call_operand.vmem [shape: bf16[32,128], index: 3, kind: input, shape index: {}]
  %s4 = inlined_call_operand.vmem [shape: f32[1,128], index: 4, kind: input, shape index: {}]
  %s5 = inlined_call_operand.hbm [shape: f32[256,128], index: 5, kind: output, shape index: {}]
  %s6 = sld [smem:[#allocation0]]
  $region53: #{tpu_custom_call.1} parent=0
    _
  %s8 = ssub.s32 1, %s6
  %s9 = scalar_select 0, %s8, %s6
  $region1: #{tpu_custom_call.1} parent=0
    #allocation2 [shape = 'u8[131072]{0}', space=vmem, size = 0x20000, scoped, tag = 'output window, operand 0']
    #allocation3 [shape = 's32[2]{0}', space=sflag, size = 0x8, scoped, tag = 'scoped memory for tpu_custom_call.1']
    %10 = vsyncpa [#allocation3], 0
    %s11 = scalar_lea.sflag [#allocation3], 1
    %12 = vsyncpa %s11, 0
    loop: start=0, step=1, limit=4
    $region2: #{tpu_custom_call.1} parent=1 // loop_pre_header
      _
    $region3: #{tpu_custom_call.1} parent=1 // loop_header
      %s14 = sphi 0, %s18
      %p15 = scmp.ge.s32.totalorder %s14, 4
      %s24 = sphi 0, %s26
      %s27 = sphi 0, %s24
      %s28 = sphi 0, %s27
      %s44 = sphi 0, %s28
      %s48 = sphi 0, %s48
      %s50 = sphi 0, %s48
      %s51 = sphi 0, %s50
      %s65 = sphi 0, %s51
      %s69 = sphi 0, %s69
      %s71 = sphi 0, %s69
      %s72 = sphi 0, %s71
      %s86 = sphi 0, %s72
      %s90 = sphi 0, %s90
      %s92 = sphi 0, %s90
      %s93 = sphi 0, %s92
      %s107 = sphi 0, %s93
      %s111 = sphi 0, %s111
      %s113 = sphi 0, %s111
      %s114 = sphi 0, %s113
      %s128 = sphi 0, %s114
      %s134 = sphi 0, %s136
      %s137 = sphi 0, %s134
      %s138 = sphi 0, %s137
      %s154 = sphi 0, %s138
    $region4: #{tpu_custom_call.1} parent=1 // loop_header_branch
      %17 = sbr.rel (%p15) target = $region8
    $region5: #{tpu_custom_call.1} parent=1 // loop_body
      %s19 = ssub.s32 %s14, 1
      %s20 = ssub.s32 %s14, 2
      %s21 = sadd.s32 %s14, 1
      %s22 = ssub.s32 %s14, %s21
      %p23 = scmp.eq.s32.totalorder %s22, 0
      %s25 = sadd.s32 %s24, 1
      %s26 = scalar_select %p23, %s24, %s25
      %p29 = pneg %p23
      %p30 = scmp.eq.s32.totalorder %s14, 1
      %p31 = por %p29, %p30
      %p32 = scmp.ne.s32.totalorder %s24, %s27
      %p33 = scmp.eq.s32.totalorder %s14, 0
      %p34 = por %p32, %p33
      %p35 = scmp.ne.s32.totalorder %s24, %s27
      %p36 = scmp.eq.s32.totalorder %s19, 1
      %p37 = por %p35, %p36
      %p38 = scmp.ne.s32.totalorder %s27, %s28
      %p39 = scmp.eq.s32.totalorder %s19, 0
      %p40 = por %p38, %p39
      %p41 = scmp.ne.s32.totalorder %s27, %s28
      %p42 = scmp.eq.s32.totalorder %s20, 1
      %p43 = por %p41, %p42
      %p45 = scmp.ne.s32.totalorder %s28, %s44
      %p46 = scmp.eq.s32.totalorder %s20, 0
      %p47 = por %p45, %p46
      %s49 = sadd.s32 %s48, 1
      %p52 = scmp.eq.s32.totalorder %s14, 1
      %p53 = scmp.ne.s32.totalorder %s48, %s50
      %p54 = scmp.eq.s32.totalorder %s14, 0
      %p55 = por %p53, %p54
      %p56 = scmp.ne.s32.totalorder %s48, %s50
      %p57 = scmp.eq.s32.totalorder %s19, 1
      %p58 = por %p56, %p57
      %p59 = scmp.ne.s32.totalorder %s50, %s51
      %p60 = scmp.eq.s32.totalorder %s19, 0
      %p61 = por %p59, %p60
      %p62 = scmp.ne.s32.totalorder %s50, %s51
      %p63 = scmp.eq.s32.totalorder %s20, 1
      %p64 = por %p62, %p63
      %p66 = scmp.ne.s32.totalorder %s51, %s65
      %p67 = scmp.eq.s32.totalorder %s20, 0
      %p68 = por %p66, %p67
      %s70 = sadd.s32 %s69, 1
      %p73 = scmp.eq.s32.totalorder %s14, 1
      %p74 = scmp.ne.s32.totalorder %s69, %s71
      %p75 = scmp.eq.s32.totalorder %s14, 0
      %p76 = por %p74, %p75
      %p77 = scmp.ne.s32.totalorder %s69, %s71
      %p78 = scmp.eq.s32.totalorder %s19, 1
      %p79 = por %p77, %p78
      %p80 = scmp.ne.s32.totalorder %s71, %s72
      %p81 = scmp.eq.s32.totalorder %s19, 0
      %p82 = por %p80, %p81
      %p83 = scmp.ne.s32.totalorder %s71, %s72
      %p84 = scmp.eq.s32.totalorder %s20, 1
      %p85 = por %p83, %p84
      %p87 = scmp.ne.s32.totalorder %s72, %s86
      %p88 = scmp.eq.s32.totalorder %s20, 0
      %p89 = por %p87, %p88
      %s91 = sadd.s32 %s90, 1
      %p94 = scmp.eq.s32.totalorder %s14, 1
      %p95 = scmp.ne.s32.totalorder %s90, %s92
      %p96 = scmp.eq.s32.totalorder %s14, 0
      %p97 = por %p95, %p96
      %p98 = scmp.ne.s32.totalorder %s90, %s92
      %p99 = scmp.eq.s32.totalorder %s19, 1
      %p100 = por %p98, %p99
      %p101 = scmp.ne.s32.totalorder %s92, %s93
      %p102 = scmp.eq.s32.totalorder %s19, 0
      %p103 = por %p101, %p102
      %p104 = scmp.ne.s32.totalorder %s92, %s93
      %p105 = scmp.eq.s32.totalorder %s20, 1
      %p106 = por %p104, %p105
      %p108 = scmp.ne.s32.totalorder %s93, %s107
      %p109 = scmp.eq.s32.totalorder %s20, 0
      %p110 = por %p108, %p109
      %s112 = sadd.s32 %s111, 1
      %p115 = scmp.eq.s32.totalorder %s14, 1
      %p116 = scmp.ne.s32.totalorder %s111, %s113
      %p117 = scmp.eq.s32.totalorder %s14, 0
      %p118 = por %p116, %p117
      %p119 = scmp.ne.s32.totalorder %s111, %s113
      %p120 = scmp.eq.s32.totalorder %s19, 1
      %p121 = por %p119, %p120
      %p122 = scmp.ne.s32.totalorder %s113, %s114
      %p123 = scmp.eq.s32.totalorder %s19, 0
      %p124 = por %p122, %p123
      %p125 = scmp.ne.s32.totalorder %s113, %s114
      %p126 = scmp.eq.s32.totalorder %s20, 1
      %p127 = por %p125, %p126
      %p129 = scmp.ne.s32.totalorder %s114, %s128
      %p130 = scmp.eq.s32.totalorder %s20, 0
      %p131 = por %p129, %p130
      %s132 = ssub.s32 %s14, %s21
      %p133 = scmp.eq.s32.totalorder %s132, 0
      %s135 = sadd.s32 %s134, 1
      %s136 = scalar_select %p133, %s134, %s135
      %p139 = pneg %p133
      %p140 = scmp.eq.s32.totalorder %s14, 1
      %p141 = por %p139, %p140
      %p142 = scmp.ne.s32.totalorder %s134, %s137
      %p143 = scmp.eq.s32.totalorder %s14, 0
      %p144 = por %p142, %p143
      %p145 = scmp.ne.s32.totalorder %s134, %s137
      %p146 = scmp.eq.s32.totalorder %s19, 1
      %p147 = por %p145, %p146
      %p148 = scmp.ne.s32.totalorder %s137, %s138
      %p149 = scmp.eq.s32.totalorder %s19, 0
      %p150 = por %p148, %p149
      %p151 = scmp.ne.s32.totalorder %s137, %s138
      %p152 = scmp.eq.s32.totalorder %s20, 1
      %p153 = por %p151, %p152
      %p155 = scmp.ne.s32.totalorder %s138, %s154
      %p156 = scmp.eq.s32.totalorder %s20, 0
      %p157 = por %p155, %p156
      %p158 = scmp.le.s32.totalorder 1, %s14
      %p159 = scmp.lt.s32.totalorder %s14, 3
      %p160 = pnand %p158, %p159
      %p161 = pneg %p160
      // Predicated region
      $region9: #{tpu_custom_call.1} parent=5 // pred_check
        _
      $region10: #{tpu_custom_call.1} parent=5 // pred_check_branch
        %163 = sbr.rel (%p160) target = $region12
      $region11: #{tpu_custom_call.1} parent=5 // pred_region
        %s164 = ssub.s32 %s14, 1
        // Predicated region
        $region13: #{tpu_custom_call.1} parent=11 // pred_check
          %p165 = pneg %p61
        $region14: #{tpu_custom_call.1} parent=11 // pred_check_branch
          %167 = sbr.rel (%p165) target = $region16
        $region15: #{tpu_custom_call.1} parent=11 // pred_region
          _
        $region16: #{tpu_custom_call.1} parent=11 // pred_fallthru
          _
        // Predicated region
        $region17: #{tpu_custom_call.1} parent=11 // pred_check
          %p168 = pneg %p82
        $region18: #{tpu_custom_call.1} parent=11 // pred_check_branch
          %170 = sbr.rel (%p168) target = $region20
        $region19: #{tpu_custom_call.1} parent=11 // pred_region
          _
        $region20: #{tpu_custom_call.1} parent=11 // pred_fallthru
          _
        // Predicated region
        $region21: #{tpu_custom_call.1} parent=11 // pred_check
          %p171 = pneg %p103
        $region22: #{tpu_custom_call.1} parent=11 // pred_check_branch
          %173 = sbr.rel (%p171) target = $region24
        $region23: #{tpu_custom_call.1} parent=11 // pred_region
          _
        $region24: #{tpu_custom_call.1} parent=11 // pred_fallthru
          _
        // Predicated region
        $region25: #{tpu_custom_call.1} parent=11 // pred_check
          %p174 = pneg %p124
        $region26: #{tpu_custom_call.1} parent=11 // pred_check_branch
          %176 = sbr.rel (%p174) target = $region28
        $region27: #{tpu_custom_call.1} parent=11 // pred_region
          _
        $region28: #{tpu_custom_call.1} parent=11 // pred_fallthru
          _
      $region12: #{tpu_custom_call.1} parent=5 // pred_fallthru
        _
      %p177 = scmp.lt.s32.totalorder %s14, 2
      // Predicated region
      $region29: #{tpu_custom_call.1} parent=5 // pred_check
        %p178 = pneg %p177
      $region30: #{tpu_custom_call.1} parent=5 // pred_check_branch
        %180 = sbr.rel (%p178) target = $region32
      $region31: #{tpu_custom_call.1} parent=5 // pred_region
        // Predicated region
        $region33: #{tpu_custom_call.1} parent=31 // pred_check
          %p181 = pneg %p34
        $region34: #{tpu_custom_call.1} parent=31 // pred_check_branch
          %183 = sbr.rel (%p181) target = $region36
        $region35: #{tpu_custom_call.1} parent=31 // pred_region
          %s184 = smul.u32 16, %s14
          %p185 = scmp.lt.s32.totalorder %s184, 31
          %s186 = scalar_select %p185, %s184, 31
          %s187 = smul.addr %s186, 8
          %s188 = scalar_lea.vmem %s0, %s187
          %s189 = smul.u32 16, %s14
        $region36: #{tpu_custom_call.1} parent=31 // pred_fallthru
          _
      $region32: #{tpu_custom_call.1} parent=5 // pred_fallthru
        _
      %p190 = scmp.le.s32.totalorder 1, %s14
      %p191 = scmp.lt.s32.totalorder %s14, 3
      %p192 = pnand %p190, %p191
      %p193 = pneg %p192
      // Predicated region
      $region37: #{tpu_custom_call.1} parent=5 // pred_check
        _
      $region38: #{tpu_custom_call.1} parent=5 // pred_check_branch
        %195 = sbr.rel (%p192) target = $region40
      $region39: #{tpu_custom_call.1} parent=5 // pred_region
        %s196 = ssub.s32 %s14, 1
        %s197 = smul.u32 16, %s19
        %p198 = scmp.lt.s32.totalorder %s197, 31
        %s199 = scalar_select %p198, %s197, 31
        %s200 = smul.addr %s199, 8
        %s201 = scalar_lea.vmem %s0, %s200
        %p202 = pneg %p40
        %p203 = pneg %p37
        %p204 = pneg %p61
        %p205 = pneg %p58
        %p206 = pneg %p82
        %p207 = pneg %p79
        %p208 = pneg %p103
        %p209 = pneg %p100
        %p210 = pneg %p124
        %p211 = pneg %p121
        %p212 = pneg %p150
        %p213 = pneg %p147
        %s214 = sand.u32 %s137, 1
        %s215 = scalar_lea.sflag [#allocation3], %s214
        %s216 = sand.u32 %s137, 1
        %s217 = smul.addr %s216, 128
        %s218 = scalar_lea.vmem [#allocation2], %s217
        %s219 = smul.u32 16, %s19
        %p220 = scmp.lt.s32.totalorder %s219, 31
        %s221 = scalar_select %p220, %s219, 31
        %s222 = smul.addr %s221, 8
        %s223 = scalar_lea.vmem %s0, %s222
        %s224 = smul.u32 16, %s19
        %s225 = smul.u32 16, %s19
        %v227 = vld [vmem:[%s223] sm:$0xff]
        %v228 = vld [vmem:[%s223 + $0x8] sm:$0xff]
        %v229 = vld [vmem:[%s223 + $0x10] sm:$0xff]
        %v230 = vld [vmem:[%s223 + $0x18] sm:$0xff]
        %v231 = vld [vmem:[%s223 + $0x20] sm:$0xff]
        %v232 = vld [vmem:[%s223 + $0x28] sm:$0xff]
        %v233 = vld [vmem:[%s223 + $0x30] sm:$0xff]
        %v234 = vld [vmem:[%s223 + $0x38] sm:$0xff]
        %v235 = vld [vmem:[%s223 + $0x40] sm:$0xff]
        %v236 = vld [vmem:[%s223 + $0x48] sm:$0xff]
        %v237 = vld [vmem:[%s223 + $0x50] sm:$0xff]
        %v238 = vld [vmem:[%s223 + $0x58] sm:$0xff]
        %v239 = vld [vmem:[%s223 + $0x60] sm:$0xff]
        %v240 = vld [vmem:[%s223 + $0x68] sm:$0xff]
        %v241 = vld [vmem:[%s223 + $0x70] sm:$0xff]
        %v242 = vld [vmem:[%s223 + $0x78] sm:$0xff]
        %v243 = vld [vmem:[%s1] sm:$0x1]
        %245 = vset.pattern.permute.xlu0 0
        %246 = vperm.xlu0 %245, %v227
        %v247 = vpop.permute.xlu0 %246
        %250 = vset.pattern.permute.xlu0 0
        %251 = vperm.xlu0 %250, %v228
        %v252 = vpop.permute.xlu0 %251
        %255 = vset.pattern.permute.xlu0 0
        %256 = vperm.xlu0 %255, %v229
        %v257 = vpop.permute.xlu0 %256
        %260 = vset.pattern.permute.xlu0 0
        %261 = vperm.xlu0 %260, %v230
        %v262 = vpop.permute.xlu0 %261
        %265 = vset.pattern.permute.xlu0 0
        %266 = vperm.xlu0 %265, %v231
        %v267 = vpop.permute.xlu0 %266
        %270 = vset.pattern.permute.xlu0 0
        %271 = vperm.xlu0 %270, %v232
        %v272 = vpop.permute.xlu0 %271
        %275 = vset.pattern.permute.xlu0 0
        %276 = vperm.xlu0 %275, %v233
        %v277 = vpop.permute.xlu0 %276
        %280 = vset.pattern.permute.xlu0 0
        %281 = vperm.xlu0 %280, %v234
        %v282 = vpop.permute.xlu0 %281
        %285 = vset.pattern.permute.xlu0 0
        %286 = vperm.xlu0 %285, %v235
        %v287 = vpop.permute.xlu0 %286
        %290 = vset.pattern.permute.xlu0 0
        %291 = vperm.xlu0 %290, %v236
        %v292 = vpop.permute.xlu0 %291
        %295 = vset.pattern.permute.xlu0 0
        %296 = vperm.xlu0 %295, %v237
        %v297 = vpop.permute.xlu0 %296
        %300 = vset.pattern.permute.xlu0 0
        %301 = vperm.xlu0 %300, %v238
        %v302 = vpop.permute.xlu0 %301
        %305 = vset.pattern.permute.xlu0 0
        %306 = vperm.xlu0 %305, %v239
        %v307 = vpop.permute.xlu0 %306
        %310 = vset.pattern.permute.xlu0 0
        %311 = vperm.xlu0 %310, %v240
        %v312 = vpop.permute.xlu0 %311
        %315 = vset.pattern.permute.xlu0 0
        %316 = vperm.xlu0 %315, %v241
        %v317 = vpop.permute.xlu0 %316
        %320 = vset.pattern.permute.xlu0 0
        %321 = vperm.xlu0 %320, %v242
        %v322 = vpop.permute.xlu0 %321
        %v324 = vlaneseq
        %v325 = vshrl.u32 %v324, 7
        %v326 = vsub.s32 0, %v325
        %v327 = vrot.slane %v243, %v326
        %v328 = vmul.f32 %v247, %v327
        %v329 = vmul.f32 %v252, %v327
        %v330 = vmul.f32 %v257, %v327
        %v331 = vmul.f32 %v262, %v327
        %v332 = vmul.f32 %v267, %v327
        %v333 = vmul.f32 %v272, %v327
        %v334 = vmul.f32 %v277, %v327
        %v335 = vmul.f32 %v282, %v327
        %v336 = vmul.f32 %v287, %v327
        %v337 = vmul.f32 %v292, %v327
        %v338 = vmul.f32 %v297, %v327
        %v339 = vmul.f32 %v302, %v327
        %v340 = vmul.f32 %v307, %v327
        %v341 = vmul.f32 %v312, %v327
        %v342 = vmul.f32 %v317, %v327
        %v343 = vmul.f32 %v322, %v327
        %v344 = vld [vmem:[%s1 + $0x1] sm:$0x1]
        %345 = vset.pattern.permute.xlu0 1
        %346 = vperm.xlu0 %345, %v227
        %v347 = vpop.permute.xlu0 %346
        %349 = vset.pattern.permute.xlu0 1
        %350 = vperm.xlu0 %349, %v228
        %v351 = vpop.permute.xlu0 %350
        %353 = vset.pattern.permute.xlu0 1
        %354 = vperm.xlu0 %353, %v229
        %v355 = vpop.permute.xlu0 %354
        %357 = vset.pattern.permute.xlu0 1
        %358 = vperm.xlu0 %357, %v230
        %v359 = vpop.permute.xlu0 %358
        %361 = vset.pattern.permute.xlu0 1
        %362 = vperm.xlu0 %361, %v231
        %v363 = vpop.permute.xlu0 %362
        %365 = vset.pattern.permute.xlu0 1
        %366 = vperm.xlu0 %365, %v232
        %v367 = vpop.permute.xlu0 %366
        %369 = vset.pattern.permute.xlu0 1
        %370 = vperm.xlu0 %369, %v233
        %v371 = vpop.permute.xlu0 %370
        %373 = vset.pattern.permute.xlu0 1
        %374 = vperm.xlu0 %373, %v234
        %v375 = vpop.permute.xlu0 %374
        %377 = vset.pattern.permute.xlu0 1
        %378 = vperm.xlu0 %377, %v235
        %v379 = vpop.permute.xlu0 %378
        %381 = vset.pattern.permute.xlu0 1
        %382 = vperm.xlu0 %381, %v236
        %v383 = vpop.permute.xlu0 %382
        %385 = vset.pattern.permute.xlu0 1
        %386 = vperm.xlu0 %385, %v237
        %v387 = vpop.permute.xlu0 %386
        %389 = vset.pattern.permute.xlu0 1
        %390 = vperm.xlu0 %389, %v238
        %v391 = vpop.permute.xlu0 %390
        %393 = vset.pattern.permute.xlu0 1
        %394 = vperm.xlu0 %393, %v239
        %v395 = vpop.permute.xlu0 %394
        %397 = vset.pattern.permute.xlu0 1
        %398 = vperm.xlu0 %397, %v240
        %v399 = vpop.permute.xlu0 %398
        %401 = vset.pattern.permute.xlu0 1
        %402 = vperm.xlu0 %401, %v241
        %v403 = vpop.permute.xlu0 %402
        %405 = vset.pattern.permute.xlu0 1
        %406 = vperm.xlu0 %405, %v242
        %v407 = vpop.permute.xlu0 %406
        %v409 = vlaneseq
        %v410 = vshrl.u32 %v409, 7
        %v411 = vsub.s32 0, %v410
        %v412 = vrot.slane %v344, %v411
        %v413 = vmul.f32 %v347, %v412
        %v414 = vmul.f32 %v351, %v412
        %v415 = vmul.f32 %v355, %v412
        %v416 = vmul.f32 %v359, %v412
        %v417 = vmul.f32 %v363, %v412
        %v418 = vmul.f32 %v367, %v412
        %v419 = vmul.f32 %v371, %v412
        %v420 = vmul.f32 %v375, %v412
        %v421 = vmul.f32 %v379, %v412
        %v422 = vmul.f32 %v383, %v412
        %v423 = vmul.f32 %v387, %v412
        %v424 = vmul.f32 %v391, %v412
        %v425 = vmul.f32 %v395, %v412
        %v426 = vmul.f32 %v399, %v412
        %v427 = vmul.f32 %v403, %v412
        %v428 = vmul.f32 %v407, %v412
        %v429 = vadd.f32 %v328, %v413
        %v430 = vadd.f32 %v329, %v414
        %v431 = vadd.f32 %v330, %v415
        %v432 = vadd.f32 %v331, %v416
        %v433 = vadd.f32 %v332, %v417
        %v434 = vadd.f32 %v333, %v418
        %v435 = vadd.f32 %v334, %v419
        %v436 = vadd.f32 %v335, %v420
        %v437 = vadd.f32 %v336, %v421
        %v438 = vadd.f32 %v337, %v422
        %v439 = vadd.f32 %v338, %v423
        %v440 = vadd.f32 %v339, %v424
        %v441 = vadd.f32 %v340, %v425
        %v442 = vadd.f32 %v341, %v426
        %v443 = vadd.f32 %v342, %v427
        %v444 = vadd.f32 %v343, %v428
        %v445 = vld [vmem:[%s1 + $0x2] sm:$0x1]
        %446 = vset.pattern.permute.xlu0 2
        %447 = vperm.xlu0 %446, %v227
        %v448 = vpop.permute.xlu0 %447
        %450 = vset.pattern.permute.xlu0 2
        %451 = vperm.xlu0 %450, %v228
        %v452 = vpop.permute.xlu0 %451
        %454 = vset.pattern.permute.xlu0 2
        %455 = vperm.xlu0 %454, %v229
        %v456 = vpop.permute.xlu0 %455
        %458 = vset.pattern.permute.xlu0 2
        %459 = vperm.xlu0 %458, %v230
        %v460 = vpop.permute.xlu0 %459
        %462 = vset.pattern.permute.xlu0 2
        %463 = vperm.xlu0 %462, %v231
        %v464 = vpop.permute.xlu0 %463
        %466 = vset.pattern.permute.xlu0 2
        %467 = vperm.xlu0 %466, %v232
        %v468 = vpop.permute.xlu0 %467
        %470 = vset.pattern.permute.xlu0 2
        %471 = vperm.xlu0 %470, %v233
        %v472 = vpop.permute.xlu0 %471
        %474 = vset.pattern.permute.xlu0 2
        %475 = vperm.xlu0 %474, %v234
        %v476 = vpop.permute.xlu0 %475
        %478 = vset.pattern.permute.xlu0 2
        %479 = vperm.xlu0 %478, %v235
        %v480 = vpop.permute.xlu0 %479
        %482 = vset.pattern.permute.xlu0 2
        %483 = vperm.xlu0 %482, %v236
        %v484 = vpop.permute.xlu0 %483
        %486 = vset.pattern.permute.xlu0 2
        %487 = vperm.xlu0 %486, %v237
        %v488 = vpop.permute.xlu0 %487
        %490 = vset.pattern.permute.xlu0 2
        %491 = vperm.xlu0 %490, %v238
        %v492 = vpop.permute.xlu0 %491
        %494 = vset.pattern.permute.xlu0 2
        %495 = vperm.xlu0 %494, %v239
        %v496 = vpop.permute.xlu0 %495
        %498 = vset.pattern.permute.xlu0 2
        %499 = vperm.xlu0 %498, %v240
        %v500 = vpop.permute.xlu0 %499
        %502 = vset.pattern.permute.xlu0 2
        %503 = vperm.xlu0 %502, %v241
        %v504 = vpop.permute.xlu0 %503
        %506 = vset.pattern.permute.xlu0 2
        %507 = vperm.xlu0 %506, %v242
        %v508 = vpop.permute.xlu0 %507
        %v510 = vlaneseq
        %v511 = vshrl.u32 %v510, 7
        %v512 = vsub.s32 0, %v511
        %v513 = vrot.slane %v445, %v512
        %v514 = vmul.f32 %v448, %v513
        %v515 = vmul.f32 %v452, %v513
        %v516 = vmul.f32 %v456, %v513
        %v517 = vmul.f32 %v460, %v513
        %v518 = vmul.f32 %v464, %v513
        %v519 = vmul.f32 %v468, %v513
        %v520 = vmul.f32 %v472, %v513
        %v521 = vmul.f32 %v476, %v513
        %v522 = vmul.f32 %v480, %v513
        %v523 = vmul.f32 %v484, %v513
        %v524 = vmul.f32 %v488, %v513
        %v525 = vmul.f32 %v492, %v513
        %v526 = vmul.f32 %v496, %v513
        %v527 = vmul.f32 %v500, %v513
        %v528 = vmul.f32 %v504, %v513
        %v529 = vmul.f32 %v508, %v513
        %v530 = vadd.f32 %v429, %v514
        %v531 = vadd.f32 %v430, %v515
        %v532 = vadd.f32 %v431, %v516
        %v533 = vadd.f32 %v432, %v517
        %v534 = vadd.f32 %v433, %v518
        %v535 = vadd.f32 %v434, %v519
        %v536 = vadd.f32 %v435, %v520
        %v537 = vadd.f32 %v436, %v521
        %v538 = vadd.f32 %v437, %v522
        %v539 = vadd.f32 %v438, %v523
        %v540 = vadd.f32 %v439, %v524
        %v541 = vadd.f32 %v440, %v525
        %v542 = vadd.f32 %v441, %v526
        %v543 = vadd.f32 %v442, %v527
        %v544 = vadd.f32 %v443, %v528
        %v545 = vadd.f32 %v444, %v529
        %v546 = vld [vmem:[%s1 + $0x3] sm:$0x1]
        %547 = vset.pattern.permute.xlu0 3
        %548 = vperm.xlu0 %547, %v227
        %v549 = vpop.permute.xlu0 %548
        %551 = vset.pattern.permute.xlu0 3
        %552 = vperm.xlu0 %551, %v228
        %v553 = vpop.permute.xlu0 %552
        %555 = vset.pattern.permute.xlu0 3
        %556 = vperm.xlu0 %555, %v229
        %v557 = vpop.permute.xlu0 %556
        %559 = vset.pattern.permute.xlu0 3
        %560 = vperm.xlu0 %559, %v230
        %v561 = vpop.permute.xlu0 %560
        %563 = vset.pattern.permute.xlu0 3
        %564 = vperm.xlu0 %563, %v231
        %v565 = vpop.permute.xlu0 %564
        %567 = vset.pattern.permute.xlu0 3
        %568 = vperm.xlu0 %567, %v232
        %v569 = vpop.permute.xlu0 %568
        %571 = vset.pattern.permute.xlu0 3
        %572 = vperm.xlu0 %571, %v233
        %v573 = vpop.permute.xlu0 %572
        %575 = vset.pattern.permute.xlu0 3
        %576 = vperm.xlu0 %575, %v234
        %v577 = vpop.permute.xlu0 %576
        %579 = vset.pattern.permute.xlu0 3
        %580 = vperm.xlu0 %579, %v235
        %v581 = vpop.permute.xlu0 %580
        %583 = vset.pattern.permute.xlu0 3
        %584 = vperm.xlu0 %583, %v236
        %v585 = vpop.permute.xlu0 %584
        %587 = vset.pattern.permute.xlu0 3
        %588 = vperm.xlu0 %587, %v237
        %v589 = vpop.permute.xlu0 %588
        %591 = vset.pattern.permute.xlu0 3
        %592 = vperm.xlu0 %591, %v238
        %v593 = vpop.permute.xlu0 %592
        %595 = vset.pattern.permute.xlu0 3
        %596 = vperm.xlu0 %595, %v239
        %v597 = vpop.permute.xlu0 %596
        %599 = vset.pattern.permute.xlu0 3
        %600 = vperm.xlu0 %599, %v240
        %v601 = vpop.permute.xlu0 %600
        %603 = vset.pattern.permute.xlu0 3
        %604 = vperm.xlu0 %603, %v241
        %v605 = vpop.permute.xlu0 %604
        %607 = vset.pattern.permute.xlu0 3
        %608 = vperm.xlu0 %607, %v242
        %v609 = vpop.permute.xlu0 %608
        %v611 = vlaneseq
        %v612 = vshrl.u32 %v611, 7
        %v613 = vsub.s32 0, %v612
        %v614 = vrot.slane %v546, %v613
        %v615 = vmul.f32 %v549, %v614
        %v616 = vmul.f32 %v553, %v614
        %v617 = vmul.f32 %v557, %v614
        %v618 = vmul.f32 %v561, %v614
        %v619 = vmul.f32 %v565, %v614
        %v620 = vmul.f32 %v569, %v614
        %v621 = vmul.f32 %v573, %v614
        %v622 = vmul.f32 %v577, %v614
        %v623 = vmul.f32 %v581, %v614
        %v624 = vmul.f32 %v585, %v614
        %v625 = vmul.f32 %v589, %v614
        %v626 = vmul.f32 %v593, %v614
        %v627 = vmul.f32 %v597, %v614
        %v628 = vmul.f32 %v601, %v614
        %v629 = vmul.f32 %v605, %v614
        %v630 = vmul.f32 %v609, %v614
        %v631 = vadd.f32 %v530, %v615
        %v632 = vadd.f32 %v531, %v616
        %v633 = vadd.f32 %v532, %v617
        %v634 = vadd.f32 %v533, %v618
        %v635 = vadd.f32 %v534, %v619
        %v636 = vadd.f32 %v535, %v620
        %v637 = vadd.f32 %v536, %v621
        %v638 = vadd.f32 %v537, %v622
        %v639 = vadd.f32 %v538, %v623
        %v640 = vadd.f32 %v539, %v624
        %v641 = vadd.f32 %v540, %v625
        %v642 = vadd.f32 %v541, %v626
        %v643 = vadd.f32 %v542, %v627
        %v644 = vadd.f32 %v543, %v628
        %v645 = vadd.f32 %v544, %v629
        %v646 = vadd.f32 %v545, %v630
        %v647 = vld [vmem:[%s2] sm:$0x1]
        %v649 = vlaneseq
        %v650 = vshrl.u32 %v649, 7
        %v651 = vsub.s32 0, %v650
        %v652 = vrot.slane %v647, %v651
        %v654 = vadd.f32 %v631, %v652
        %v655 = vadd.f32 %v632, %v652
        %v656 = vadd.f32 %v633, %v652
        %v657 = vadd.f32 %v634, %v652
        %v658 = vadd.f32 %v635, %v652
        %v659 = vadd.f32 %v636, %v652
        %v660 = vadd.f32 %v637, %v652
        %v661 = vadd.f32 %v638, %v652
        %v662 = vadd.f32 %v639, %v652
        %v663 = vadd.f32 %v640, %v652
        %v664 = vadd.f32 %v641, %v652
        %v665 = vadd.f32 %v642, %v652
        %v666 = vadd.f32 %v643, %v652
        %v667 = vadd.f32 %v644, %v652
        %v668 = vadd.f32 %v645, %v652
        %v669 = vadd.f32 %v646, %v652
        %v670 = vmax.f32 %v654, 0.0
        %v671 = vmax.f32 %v655, 0.0
        %v672 = vmax.f32 %v656, 0.0
        %v673 = vmax.f32 %v657, 0.0
        %v674 = vmax.f32 %v658, 0.0
        %v675 = vmax.f32 %v659, 0.0
        %v676 = vmax.f32 %v660, 0.0
        %v677 = vmax.f32 %v661, 0.0
        %v678 = vmax.f32 %v662, 0.0
        %v679 = vmax.f32 %v663, 0.0
        %v680 = vmax.f32 %v664, 0.0
        %v681 = vmax.f32 %v665, 0.0
        %v682 = vmax.f32 %v666, 0.0
        %v683 = vmax.f32 %v667, 0.0
        %v684 = vmax.f32 %v668, 0.0
        %v685 = vmax.f32 %v669, 0.0
        %v686 = vpack.c.bf16 %v671, %v670
        %v687 = vpack.c.bf16 %v673, %v672
        %v688 = vpack.c.bf16 %v675, %v674
        %v689 = vpack.c.bf16 %v677, %v676
        %v690 = vpack.c.bf16 %v679, %v678
        %v691 = vpack.c.bf16 %v681, %v680
        %v692 = vpack.c.bf16 %v683, %v682
        %v693 = vpack.c.bf16 %v685, %v684
        %v694 = vld [vmem:[%s3] sm:$0xf]
        %v695 = vld [vmem:[%s3 + $0x4] sm:$0xf]
        %v696 = vld [vmem:[%s3 + $0x8] sm:$0xf]
        %v697 = vld [vmem:[%s3 + $0xc] sm:$0xf]
        %v698 = vld [vmem:[%s4] sm:$0x1]
        %v700 = vlaneseq
        %v701 = vshrl.u32 %v700, 7
        %v702 = vsub.s32 0, %v701
        %v703 = vrot.slane %v698, %v702
        %v709 = vunpack.c.l.b16 %v694
        %v710 = vunpack.c.l.b16 %v695
        %v711 = vunpack.c.l.b16 %v696
        %v712 = vunpack.c.l.b16 %v697
        %v713 = vpack.c.b16 %v710, %v709
        %v714 = vpack.c.b16 %v712, %v711
        %vm717 = vcmask 261120
        %v719 = vsel %vm717, %v686, 0
        %v722 = vsel %vm717, %v687, 0
        %v725 = vsel %vm717, %v688, 0
        %v728 = vsel %vm717, %v689, 0
        %v731 = vsel %vm717, %v690, 0
        %v734 = vsel %vm717, %v691, 0
        %v737 = vsel %vm717, %v692, 0
        %v740 = vsel %vm717, %v693, 0
        %742 = vmatprep.subr.bf16.mxu0 0
        %743 = vmatpush1.bf16.msra.mxu0 %v713
        %744 = vmatprep.subr.bf16.mxu0 0
        %745 = vmatpush1.bf16.msra.mxu0 %v714
        %746 = vmatprep.subr.bf16.mxu0 0
        %747 = vmatpush1.bf16.msra.mxu0 0
        %748 = vmatprep.subr.bf16.mxu0 0
        %749 = vmatpush1.bf16.msra.mxu0 0
        %750 = vmatprep.subr.bf16.mxu0 0
        %751 = vmatpush1.bf16.msra.mxu0 0
        %752 = vmatprep.subr.bf16.mxu0 0
        %753 = vmatpush1.bf16.msra.mxu0 0
        %754 = vmatprep.subr.bf16.mxu0 0
        %755 = vmatpush1.bf16.msra.mxu0 0
        %756 = vmatprep.subr.bf16.mxu0 0
        %757 = vmatpush1.bf16.msra.mxu0 0
        %758 = vmatprep.subr.bf16.mxu0 0
        %759 = vmatpush1.bf16.msra.mxu0 0
        %760 = vmatprep.subr.bf16.mxu0 0
        %761 = vmatpush1.bf16.msra.mxu0 0
        %762 = vmatprep.subr.bf16.mxu0 0
        %763 = vmatpush1.bf16.msra.mxu0 0
        %764 = vmatprep.subr.bf16.mxu0 0
        %765 = vmatpush1.bf16.msra.mxu0 0
        %766 = vmatprep.subr.bf16.mxu0 0
        %767 = vmatpush1.bf16.msra.mxu0 0
        %768 = vmatprep.subr.bf16.mxu0 0
        %769 = vmatpush1.bf16.msra.mxu0 0
        %770 = vmatprep.subr.bf16.mxu0 0
        %771 = vmatpush1.bf16.msra.mxu0 0
        %772 = vmatprep.subr.bf16.mxu0 0
        %773 = vmatpush1.bf16.msra.mxu0 0
        %774 = vmatprep.mubr.bf16.mxu0 0
        %775 = vmatmul.mubr.bf16.gmra.mrb[0].mxu0 %v719
        %v776 = vpop.f32.mrb[0].mxu0
        %v777 = vadd.f32 %v703, %v776
        %v778 = vpop.f32.mrb[0].mxu0
        %v779 = vpop.f32.mrb[0].mxu0
        %v780 = vadd.f32 %v703, %v779
        %v781 = vpop.f32.mrb[0].mxu0
        %782 = vmatprep.mubr.bf16.mxu0 0
        %783 = vmatmul.mubr.bf16.gmra.mrb[0].mxu0 %v722
        %v784 = vpop.f32.mrb[0].mxu0
        %v785 = vadd.f32 %v703, %v784
        %v786 = vpop.f32.mrb[0].mxu0
        %v787 = vpop.f32.mrb[0].mxu0
        %v788 = vadd.f32 %v703, %v787
        %v789 = vpop.f32.mrb[0].mxu0
        %790 = vmatprep.mubr.bf16.mxu0 0
        %791 = vmatmul.mubr.bf16.gmra.mrb[0].mxu0 %v725
        %v792 = vpop.f32.mrb[0].mxu0
        %v793 = vadd.f32 %v703, %v792
        %v794 = vpop.f32.mrb[0].mxu0
        %v795 = vpop.f32.mrb[0].mxu0
        %v796 = vadd.f32 %v703, %v795
        %v797 = vpop.f32.mrb[0].mxu0
        %798 = vmatprep.mubr.bf16.mxu0 0
        %799 = vmatmul.mubr.bf16.gmra.mrb[0].mxu0 %v728
        %v800 = vpop.f32.mrb[0].mxu0
        %v801 = vadd.f32 %v703, %v800
        %v802 = vpop.f32.mrb[0].mxu0
        %v803 = vpop.f32.mrb[0].mxu0
        %v804 = vadd.f32 %v703, %v803
        %v805 = vpop.f32.mrb[0].mxu0
        %806 = vmatprep.mubr.bf16.mxu0 0
        %807 = vmatmul.mubr.bf16.gmra.mrb[0].mxu0 %v731
        %v808 = vpop.f32.mrb[0].mxu0
        %v809 = vadd.f32 %v703, %v808
        %v810 = vpop.f32.mrb[0].mxu0
        %v811 = vpop.f32.mrb[0].mxu0
        %v812 = vadd.f32 %v703, %v811
        %v813 = vpop.f32.mrb[0].mxu0
        %814 = vmatprep.mubr.bf16.mxu0 0
        %815 = vmatmul.mubr.bf16.gmra.mrb[0].mxu0 %v734
        %v816 = vpop.f32.mrb[0].mxu0
        %v817 = vadd.f32 %v703, %v816
        %v818 = vpop.f32.mrb[0].mxu0
        %v819 = vpop.f32.mrb[0].mxu0
        %v820 = vadd.f32 %v703, %v819
        %v821 = vpop.f32.mrb[0].mxu0
        %822 = vmatprep.mubr.bf16.mxu0 0
        %823 = vmatmul.mubr.bf16.gmra.mrb[0].mxu0 %v737
        %v824 = vpop.f32.mrb[0].mxu0
        %v825 = vadd.f32 %v703, %v824
        %v826 = vpop.f32.mrb[0].mxu0
        %v827 = vpop.f32.mrb[0].mxu0
        %v828 = vadd.f32 %v703, %v827
        %v829 = vpop.f32.mrb[0].mxu0
        %830 = vmatprep.mubr.bf16.mxu0 0
        %831 = vmatmul.mubr.bf16.gmra.mrb[0].mxu0 %v740
        %v832 = vpop.f32.mrb[0].mxu0
        %v833 = vadd.f32 %v703, %v832
        %v834 = vpop.f32.mrb[0].mxu0
        %v835 = vpop.f32.mrb[0].mxu0
        %v836 = vadd.f32 %v703, %v835
        %v837 = vpop.f32.mrb[0].mxu0
        %838 = vdwg.mxu0
        %839 = vst [vmem:[%s218] sm:$0xff] %v777
        %840 = vst [vmem:[%s218 + $0x8] sm:$0xff] %v780
        %841 = vst [vmem:[%s218 + $0x10] sm:$0xff] %v785
        %842 = vst [vmem:[%s218 + $0x18] sm:$0xff] %v788
        %843 = vst [vmem:[%s218 + $0x20] sm:$0xff] %v793
        %844 = vst [vmem:[%s218 + $0x28] sm:$0xff] %v796
        %845 = vst [vmem:[%s218 + $0x30] sm:$0xff] %v801
        %846 = vst [vmem:[%s218 + $0x38] sm:$0xff] %v804
        %847 = vst [vmem:[%s218 + $0x40] sm:$0xff] %v809
        %848 = vst [vmem:[%s218 + $0x48] sm:$0xff] %v812
        %849 = vst [vmem:[%s218 + $0x50] sm:$0xff] %v817
        %850 = vst [vmem:[%s218 + $0x58] sm:$0xff] %v820
        %851 = vst [vmem:[%s218 + $0x60] sm:$0xff] %v825
        %852 = vst [vmem:[%s218 + $0x68] sm:$0xff] %v828
        %853 = vst [vmem:[%s218 + $0x70] sm:$0xff] %v833
        %854 = vst [vmem:[%s218 + $0x78] sm:$0xff] %v836
        %s855 = sand.u32 %s137, 1
        %s856 = scalar_lea.sflag [#allocation3], %s855
        %s857 = sand.u32 %s137, 1
        %s858 = smul.addr %s857, 128
        %s859 = scalar_lea.vmem [#allocation2], %s858
        // Predicated region
        $region41: #{tpu_custom_call.1} parent=39 // pred_check
          %p860 = pneg %p147
        $region42: #{tpu_custom_call.1} parent=39 // pred_check_branch
          %862 = sbr.rel (%p860) target = $region44
        $region43: #{tpu_custom_call.1} parent=39 // pred_region
          %s863 = smul.u32 16, %s19
          %s865 = ssub.s32 2048, 2048
          %866 = vsyncadd %s856, %s865
          %s867 = smul.addr %s863, 128
          %s868 = scalar_lea.hbm %s5, %s867
          %s869 = sshll.u32 %s859, 4
          %s870 = int_to_ptr.vmem [resolvable:$true] %s869
          %875 = dma.vmem_to_hbm [thread:$0]  %s870, 2048, %s868, %s856, 128, 128, 8
        $region44: #{tpu_custom_call.1} parent=39 // pred_fallthru
          _
      $region40: #{tpu_custom_call.1} parent=5 // pred_fallthru
        _
      %p876 = scmp.le.s32.totalorder 2, %s14
      // Predicated region
      $region45: #{tpu_custom_call.1} parent=5 // pred_check
        %p877 = pneg %p876
      $region46: #{tpu_custom_call.1} parent=5 // pred_check_branch
        %879 = sbr.rel (%p877) target = $region48
      $region47: #{tpu_custom_call.1} parent=5 // pred_region
        %s880 = ssub.s32 %s14, 2
        // Predicated region
        $region49: #{tpu_custom_call.1} parent=47 // pred_check
          %p881 = pneg %p153
        $region50: #{tpu_custom_call.1} parent=47 // pred_check_branch
          %883 = sbr.rel (%p881) target = $region52
        $region51: #{tpu_custom_call.1} parent=47 // pred_region
          %s884 = sand.u32 %s138, 1
          %s885 = scalar_lea.sflag [#allocation3], %s884
          %s886 = sand.u32 %s138, 1
          %s887 = smul.addr %s886, 128
          %s888 = scalar_lea.vmem [#allocation2], %s887
          %889 = dma.done %s885, 2048
        $region52: #{tpu_custom_call.1} parent=47 // pred_fallthru
          _
      $region48: #{tpu_custom_call.1} parent=5 // pred_fallthru
        _
    $region6: #{tpu_custom_call.1} parent=1 // loop_footer
      %s18 = sadd.s32 1, %s14
    $region7: #{tpu_custom_call.1} parent=1 // loop_footer_branch
      %13 = sbr.rel target = $region3
    $region8: #{tpu_custom_call.1} parent=1 // loop_exit
      _
    %890 = vsyncpa [#allocation3], 1
    %s891 = scalar_lea.sflag [#allocation3], 1
    %892 = vsyncpa %s891, 1

</llo_original>
